<compile_context>
chip_gen: v5e
topology: v5e:2x2
jax: 0.10.0
libtpu: 0.0.40
codegen_flags: <defaults>
</compile_context>

<pallas_src>
import jax
import jax.numpy as jnp
from jax.experimental import pallas as pl
from jax.experimental.pallas import tpu as pltpu

_HIDDEN = 128
_LANE = 128
_SUBLANE = 8


def _round_up(n, m):
    return (n + m - 1) // m * m


def _choose_batch_tile(batch, block_batch):
    """Pick the batch tile (multiple of 8 sublanes) and the padded batch."""
    b_ceil = _round_up(max(batch, 1), _SUBLANE)
    tb = min(_round_up(max(block_batch, _SUBLANE), _SUBLANE), b_ceil)
    # v7x has 2 TensorCores per chip: when the batch is big enough to split,
    # make sure the "parallel" grid has at least 2 steps so both cores get a
    # tile. (No-op for tiny batches that fit a single small tile.)
    if b_ceil > 2 * _SUBLANE and tb >= b_ceil:
        tb = _round_up((b_ceil + 1) // 2, _SUBLANE)
    b_pad = _round_up(b_ceil, tb)
    return tb, b_pad


def _policy_net_kernel(x_ref, w1_ref, b1_ref, w2_ref, b2_ref, w3_ref, b3_ref,
                       out_ref):
    # fc1 + relu  (bf16 MXU inputs, f32 accumulation, f32 elementwise)
    x = x_ref[...]                                   # (tb, input_dim) bf16
    h1 = jnp.dot(x, w1_ref[...], preferred_element_type=jnp.float32)
    h1 = jnp.maximum(h1 + b1_ref[...], 0.0)

    # fc2 + relu
    h2 = jnp.dot(h1.astype(jnp.bfloat16), w2_ref[...],
                 preferred_element_type=jnp.float32)
    h2 = jnp.maximum(h2 + b2_ref[...], 0.0)

    # fc3 -> 128-lane padded logits (internal only); padded lanes carry a
    # -1e30 bias so exp() underflows to exactly 0 below.
    logits = jnp.dot(h2.astype(jnp.bfloat16), w3_ref[...],
                     preferred_element_type=jnp.float32)
    logits = logits + b3_ref[...]

    # Numerically stable softmax over the lane axis. Exact normalization:
    # full-precision divide on the (tb, 1) column, then a cheap VPU multiply.
    m = jnp.max(logits, axis=-1, keepdims=True)
    e = jnp.exp(logits - m)
    denom = jnp.sum(e, axis=-1, keepdims=True)
    inv = 1.0 / denom

    # Store only the real probability lanes (narrow writeback).
    out_dim = out_ref.shape[-1]
    out_ref[...] = (e[:, :out_dim] * inv).astype(out_ref.dtype)


def init_params(key, input_dim, output_dim, hidden=_HIDDEN):
    """PyTorch-like uniform fan-in init; weights stored [in, out], biases [1, out]."""
    ks = jax.random.split(key, 6)

    def linear(kw, kb, fan_in, fan_out):
        bound = 1.0 / jnp.sqrt(fan_in)
        w = jax.random.uniform(kw, (fan_in, fan_out), jnp.float32, -bound, bound)
        b = jax.random.uniform(kb, (1, fan_out), jnp.float32, -bound, bound)
        return w, b

    w1, b1 = linear(ks[0], ks[1], input_dim, hidden)
    w2, b2 = linear(ks[2], ks[3], hidden, hidden)
    w3, b3 = linear(ks[4], ks[5], hidden, output_dim)
    return {"w1": w1, "b1": b1, "w2": w2, "b2": b2, "w3": w3, "b3": b3}


def prepare_params(params, input_dim, output_dim, hidden=_HIDDEN):
    """One-time (outside the kernel) packing + bf16 cast of the weights.

    W1 stays un-padded (input_dim, hidden). Only the final layer is padded to
    128 output lanes so the in-kernel softmax stays lane-dense; padded logit
    lanes get a -1e30 bias so they vanish in the softmax.
    """
    out_pad = _round_up(max(output_dim, 1), _LANE)

    w3 = jnp.zeros((hidden, out_pad), jnp.float32)
    w3 = w3.at[:, :output_dim].set(params["w3"].astype(jnp.float32))
    b3 = jnp.full((1, out_pad), -1e30, jnp.float32)
    b3 = b3.at[:, :output_dim].set(params["b3"].reshape(1, output_dim))

    return {
        "w1": params["w1"].astype(jnp.bfloat16),                 # (input_dim, hidden)
        "b1": params["b1"].reshape(1, hidden).astype(jnp.float32),
        "w2": params["w2"].astype(jnp.bfloat16),                 # (hidden, hidden)
        "b2": params["b2"].reshape(1, hidden).astype(jnp.float32),
        "w3": w3.astype(jnp.bfloat16),                           # (hidden, out_pad)
        "b3": b3,                                                # (1, out_pad) f32
        "input_dim": input_dim,
        "output_dim": output_dim,
        "out_pad": out_pad,
        "hidden": hidden,
    }


def policy_net_forward(x, prepared, *, block_batch=1024):
    """x: [B, input_dim] float32. prepared: output of prepare_params()."""
    B, input_dim = x.shape
    assert input_dim == prepared["input_dim"]
    out_pad = prepared["out_pad"]
    hidden = prepared["hidden"]
    output_dim = prepared["output_dim"]

    tb, b_pad = _choose_batch_tile(B, block_batch)

    # De-padded bf16 input stream: only the batch dim is padded (with zeros);
    # the feature dim is shipped at its true width (full-dim exemption).
    x_pad = jnp.pad(x, ((0, b_pad - B), (0, 0))).astype(jnp.bfloat16)

    def batch_spec(shape):
        return pl.BlockSpec(shape, lambda i: (i, 0))

    def const_spec(shape):
        return pl.BlockSpec(shape, lambda i: (0, 0))

    matmul_flops = 2 * b_pad * (input_dim * hidden + hidden * hidden
                                + hidden * out_pad)
    bytes_accessed = (b_pad * input_dim * 2            # x (bf16, de-padded)
                      + b_pad * output_dim * 4         # probs (f32, narrow)
                      + 2 * (input_dim * hidden + hidden * hidden
                             + hidden * out_pad)       # bf16 weights
                      + 4 * (2 * hidden + out_pad))    # f32 biases
    cost = pl.CostEstimate(flops=matmul_flops,
                           transcendentals=b_pad * out_pad,
                           bytes_accessed=bytes_accessed)

    out = pl.pallas_call(
        _policy_net_kernel,
        out_shape=jax.ShapeDtypeStruct((b_pad, output_dim), jnp.float32),
        grid=(b_pad // tb,),
        in_specs=[
            batch_spec((tb, input_dim)),       # x (batch-tiled, pipelined, bf16)
            const_spec((input_dim, hidden)),   # w1 (VMEM-resident)
            const_spec((1, hidden)),           # b1
            const_spec((hidden, hidden)),      # w2
            const_spec((1, hidden)),           # b2
            const_spec((hidden, out_pad)),     # w3 (padded lanes -> -1e30 bias)
            const_spec((1, out_pad)),          # b3
        ],
        out_specs=batch_spec((tb, output_dim)),  # narrow writeback
        compiler_params=pltpu.CompilerParams(
            dimension_semantics=("parallel",),
            vmem_limit_bytes=32 * 1024 * 1024,
        ),
        cost_estimate=cost,
    )(x_pad, prepared["w1"], prepared["b1"], prepared["w2"], prepared["b2"],
      prepared["w3"], prepared["b3"])

    return out[:B]


def reference_forward(x, p):
    """Pure-f32 reference (original PyTorch semantics)."""
    h1 = jnp.maximum(x @ p["w1"] + p["b1"], 0.0)
    h2 = jnp.maximum(h1 @ p["w2"] + p["b2"], 0.0)
    logits = h2 @ p["w3"] + p["b3"]
    return jax.nn.softmax(logits, axis=1)


def reference_forward_bf16(x, prep):
    """Reference mirroring the kernel's bf16-matmul / f32-elementwise numerics."""
    h1 = jnp.dot(x.astype(jnp.bfloat16), prep["w1"],
                 preferred_element_type=jnp.float32) + prep["b1"]
    h1 = jnp.maximum(h1, 0.0)
    h2 = jnp.dot(h1.astype(jnp.bfloat16), prep["w2"],
                 preferred_element_type=jnp.float32) + prep["b2"]
    h2 = jnp.maximum(h2, 0.0)
    logits = jnp.dot(h2.astype(jnp.bfloat16), prep["w3"],
                     preferred_element_type=jnp.float32) + prep["b3"]
    return jax.nn.softmax(logits, axis=-1)[:, :prep["output_dim"]]


if __name__ == "__main__":
    key = jax.random.PRNGKey(0)
    k_x, k_p, k_big = jax.random.split(key, 3)

    batch = 2
    input_dim = 4    # e.g. CartPole observation dim
    output_dim = 2   # e.g. CartPole action dim

    x = jax.random.normal(k_x, (batch, input_dim), jnp.float32)
    params = init_params(k_p, input_dim, output_dim)
    prepared = prepare_params(params, input_dim, output_dim)

    probs = policy_net_forward(x, prepared)
    jax.block_until_ready(probs)

    ref_f32 = reference_forward(x, params)
    ref_bf16 = reference_forward_bf16(x, prepared)
    assert probs.shape == (batch, output_dim)
    assert jnp.allclose(jnp.sum(probs, axis=1), 1.0, atol=1e-4)
    assert jnp.allclose(probs, ref_bf16, atol=2e-3)
    assert jnp.allclose(probs, ref_f32, atol=2e-2)

    # Larger batch exercises a multi-tile grid (300 -> two 152-row tiles).
    big_b = 300
    x_big = jax.random.normal(k_big, (big_b, input_dim), jnp.float32)
    probs_big = policy_net_forward(x_big, prepared)
    jax.block_until_ready(probs_big)
    assert probs_big.shape == (big_b, output_dim)
    assert jnp.allclose(jnp.sum(probs_big, axis=1), 1.0, atol=1e-4)
    assert jnp.allclose(probs_big, reference_forward(x_big, params), atol=2e-2)

    # Batch larger than one tile exercises block_batch-sized tiles.
    x_huge = jax.random.normal(k_big, (2500, input_dim), jnp.float32)
    probs_huge = policy_net_forward(x_huge, prepared, block_batch=1024)
    jax.block_until_ready(probs_huge)
    assert probs_huge.shape == (2500, output_dim)
    assert jnp.allclose(jnp.sum(probs_huge, axis=1), 1.0, atol=1e-4)

    print("KERNEL_OK")
</pallas_src>

<mosaic_0001>
module attributes {stable_mosaic.version = 11 : i64} {
  func.func @_policy_net_kernel(%arg0: i32, %arg1: memref<8x4xbf16, #tpu.memory_space<vmem>>, %arg2: memref<4x128xbf16, #tpu.memory_space<vmem>>, %arg3: memref<1x128xf32, #tpu.memory_space<vmem>>, %arg4: memref<128x128xbf16, #tpu.memory_space<vmem>>, %arg5: memref<1x128xf32, #tpu.memory_space<vmem>>, %arg6: memref<128x128xbf16, #tpu.memory_space<vmem>>, %arg7: memref<1x128xf32, #tpu.memory_space<vmem>>, %arg8: memref<8x2xf32, #tpu.memory_space<vmem>>) attributes {dimension_semantics = [#tpu.dimension_semantics<parallel>], iteration_bounds = array<i64: 1>, scalar_prefetch = 0 : i64, scratch_operands = 0 : i64, tpu.core_type = #tpu.core_type<tc>, window_params = [{transform_indices = @transform_0, window_bounds = array<i64: 8, 4>}, {pipeline_mode = #tpu.pipeline_mode<synchronous>, transform_indices = @transform_1, window_bounds = array<i64: 4, 128>}, {pipeline_mode = #tpu.pipeline_mode<synchronous>, transform_indices = @transform_2, window_bounds = array<i64: 1, 128>}, {pipeline_mode = #tpu.pipeline_mode<synchronous>, transform_indices = @transform_3, window_bounds = array<i64: 128, 128>}, {pipeline_mode = #tpu.pipeline_mode<synchronous>, transform_indices = @transform_4, window_bounds = array<i64: 1, 128>}, {pipeline_mode = #tpu.pipeline_mode<synchronous>, transform_indices = @transform_5, window_bounds = array<i64: 128, 128>}, {pipeline_mode = #tpu.pipeline_mode<synchronous>, transform_indices = @transform_6, window_bounds = array<i64: 1, 128>}, {transform_indices = @transform_7, window_bounds = array<i64: 8, 2>}]} {
    %c0 = arith.constant 0 : index
    %c0_0 = arith.constant 0 : index
    %0 = vector.load %arg1[%c0, %c0_0] : memref<8x4xbf16, #tpu.memory_space<vmem>>, vector<8x4xbf16>
    %c0_1 = arith.constant 0 : index
    %c0_2 = arith.constant 0 : index
    %1 = vector.load %arg2[%c0_1, %c0_2] : memref<4x128xbf16, #tpu.memory_space<vmem>>, vector<4x128xbf16>
    %cst = arith.constant dense<0.000000e+00> : vector<8x128xf32>
    %2 = tpu.matmul %0, %1, %cst {dimension_numbers = #tpu.dot_dimension_numbers<[1], [0], [0], [1], [0, 0, 1, 1], [], []>} : vector<8x4xbf16>, vector<4x128xbf16>, vector<8x128xf32> -> vector<8x128xf32>
    %c0_3 = arith.constant 0 : index
    %c0_4 = arith.constant 0 : index
    %3 = vector.load %arg3[%c0_3, %c0_4] : memref<1x128xf32, #tpu.memory_space<vmem>>, vector<1x128xf32>
    %4 = vector.broadcast %3 : vector<1x128xf32> to vector<8x128xf32>
    %5 = arith.addf %2, %4 : vector<8x128xf32>
    %cst_5 = arith.constant 0.000000e+00 : f32
    %6 = vector.broadcast %cst_5 : f32 to vector<8x128xf32>
    %7 = arith.maximumf %5, %6 : vector<8x128xf32>
    %8 = arith.truncf %7 : vector<8x128xf32> to vector<8x128xbf16>
    %c0_6 = arith.constant 0 : index
    %c0_7 = arith.constant 0 : index
    %9 = vector.load %arg4[%c0_6, %c0_7] : memref<128x128xbf16, #tpu.memory_space<vmem>>, vector<128x128xbf16>
    %cst_8 = arith.constant dense<0.000000e+00> : vector<8x128xf32>
    %10 = tpu.matmul %8, %9, %cst_8 {dimension_numbers = #tpu.dot_dimension_numbers<[1], [0], [0], [1], [0, 0, 1, 1], [], []>} : vector<8x128xbf16>, vector<128x128xbf16>, vector<8x128xf32> -> vector<8x128xf32>
    %c0_9 = arith.constant 0 : index
    %c0_10 = arith.constant 0 : index
    %11 = vector.load %arg5[%c0_9, %c0_10] : memref<1x128xf32, #tpu.memory_space<vmem>>, vector<1x128xf32>
    %12 = vector.broadcast %11 : vector<1x128xf32> to vector<8x128xf32>
    %13 = arith.addf %10, %12 : vector<8x128xf32>
    %cst_11 = arith.constant 0.000000e+00 : f32
    %14 = vector.broadcast %cst_11 : f32 to vector<8x128xf32>
    %15 = arith.maximumf %13, %14 : vector<8x128xf32>
    %16 = arith.truncf %15 : vector<8x128xf32> to vector<8x128xbf16>
    %c0_12 = arith.constant 0 : index
    %c0_13 = arith.constant 0 : index
    %17 = vector.load %arg6[%c0_12, %c0_13] : memref<128x128xbf16, #tpu.memory_space<vmem>>, vector<128x128xbf16>
    %cst_14 = arith.constant dense<0.000000e+00> : vector<8x128xf32>
    %18 = tpu.matmul %16, %17, %cst_14 {dimension_numbers = #tpu.dot_dimension_numbers<[1], [0], [0], [1], [0, 0, 1, 1], [], []>} : vector<8x128xbf16>, vector<128x128xbf16>, vector<8x128xf32> -> vector<8x128xf32>
    %c0_15 = arith.constant 0 : index
    %c0_16 = arith.constant 0 : index
    %19 = vector.load %arg7[%c0_15, %c0_16] : memref<1x128xf32, #tpu.memory_space<vmem>>, vector<1x128xf32>
    %20 = vector.broadcast %19 : vector<1x128xf32> to vector<8x128xf32>
    %21 = arith.addf %18, %20 : vector<8x128xf32>
    %cst_17 = arith.constant dense<0xFF800000> : vector<8xf32>
    %22 = vector.multi_reduction <maximumf>, %21, %cst_17 [1] : vector<8x128xf32> to vector<8xf32>
    %23 = vector.shape_cast %22 : vector<8xf32> to vector<8x1xf32>
    %24 = vector.broadcast %23 : vector<8x1xf32> to vector<8x128xf32>
    %25 = arith.subf %21, %24 : vector<8x128xf32>
    %26 = math.exp %25 : vector<8x128xf32>
    %cst_18 = arith.constant dense<0.000000e+00> : vector<8xf32>
    %27 = vector.multi_reduction <add>, %26, %cst_18 [1] : vector<8x128xf32> to vector<8xf32>
    %28 = vector.shape_cast %27 : vector<8xf32> to vector<8x1xf32>
    %cst_19 = arith.constant 1.000000e+00 : f32
    %29 = vector.broadcast %cst_19 : f32 to vector<8x1xf32>
    %30 = arith.divf %29, %28 : vector<8x1xf32>
    %31 = vector.extract_strided_slice %26 {offsets = [0, 0], sizes = [8, 2], strides = [1, 1]} : vector<8x128xf32> to vector<8x2xf32>
    %32 = vector.broadcast %30 : vector<8x1xf32> to vector<8x2xf32>
    %33 = arith.mulf %31, %32 : vector<8x2xf32>
    %c0_20 = arith.constant 0 : index
    %c0_21 = arith.constant 0 : index
    %34 = vector.load %arg8[%c0_20, %c0_21] : memref<8x2xf32, #tpu.memory_space<vmem>>, vector<8x2xf32>
    tpu.vector_store %arg8[%c0_20, %c0_21], %33 {strides = array<i32>} : memref<8x2xf32, #tpu.memory_space<vmem>>, vector<8x2xf32>,
    return
  }
  func.func @transform_0(%arg0: i32) -> (i32, i32) {
    %c0_i32 = arith.constant 0 : i32
    %c0_i32_0 = arith.constant 0 : i32
    return %arg0, %c0_i32 : i32, i32
  }
  func.func @transform_1(%arg0: i32) -> (i32, i32) {
    %c0_i32 = arith.constant 0 : i32
    %c0_i32_0 = arith.constant 0 : i32
    %c0_i32_1 = arith.constant 0 : i32
    return %c0_i32, %c0_i32_0 : i32, i32
  }
  func.func @transform_2(%arg0: i32) -> (i32, i32) {
    %c0_i32 = arith.constant 0 : i32
    %c0_i32_0 = arith.constant 0 : i32
    %c0_i32_1 = arith.constant 0 : i32
    return %c0_i32, %c0_i32_0 : i32, i32
  }
  func.func @transform_3(%arg0: i32) -> (i32, i32) {
    %c0_i32 = arith.constant 0 : i32
    %c0_i32_0 = arith.constant 0 : i32
    %c0_i32_1 = arith.constant 0 : i32
    return %c0_i32, %c0_i32_0 : i32, i32
  }
  func.func @transform_4(%arg0: i32) -> (i32, i32) {
    %c0_i32 = arith.constant 0 : i32
    %c0_i32_0 = arith.constant 0 : i32
    %c0_i32_1 = arith.constant 0 : i32
    return %c0_i32, %c0_i32_0 : i32, i32
  }
  func.func @transform_5(%arg0: i32) -> (i32, i32) {
    %c0_i32 = arith.constant 0 : i32
    %c0_i32_0 = arith.constant 0 : i32
    %c0_i32_1 = arith.constant 0 : i32
    return %c0_i32, %c0_i32_0 : i32, i32
  }
  func.func @transform_6(%arg0: i32) -> (i32, i32) {
    %c0_i32 = arith.constant 0 : i32
    %c0_i32_0 = arith.constant 0 : i32
    %c0_i32_1 = arith.constant 0 : i32
    return %c0_i32, %c0_i32_0 : i32, i32
  }
  func.func @transform_7(%arg0: i32) -> (i32, i32) {
    %c0_i32 = arith.constant 0 : i32
    %c0_i32_0 = arith.constant 0 : i32
    return %arg0, %c0_i32 : i32, i32
  }
}

</mosaic_0001>

<llo_original>
// kernel: tpu_custom_call.1
$region0: #{tpu_custom_call.1}
  #allocation0 [shape = 'u32[]', space=smem, size = 0x4, offset = 0x4, fixed_abs, tag = 'smem constant byte address 0x4 - core index']
  #allocation1 [shape = 'u32[72,128]{1,0:T(1,128)}', space=vmem, size = 0x9000, scoped, tag = 'internal scratch']
  %s0 = inlined_call_operand.vmem [shape: bf16[8,4], index: 0, kind: input, shape index: {}]
  %s1 = inlined_call_operand.vmem [shape: bf16[4,128], index: 1, kind: input, shape index: {}]
  %s2 = inlined_call_operand.vmem [shape: f32[1,128], index: 2, kind: input, shape index: {}]
  %s3 = inlined_call_operand.hbm [shape: bf16[128,128], index: 3, kind: input, shape index: {}]
  %s4 = inlined_call_operand.vmem [shape: f32[1,128], index: 4, kind: input, shape index: {}]
  %s5 = inlined_call_operand.hbm [shape: bf16[128,128], index: 5, kind: input, shape index: {}]
  %s6 = inlined_call_operand.vmem [shape: f32[1,128], index: 6, kind: input, shape index: {}]
  %s7 = inlined_call_operand.vmem [shape: f32[8,2], index: 7, kind: output, shape index: {}]
  %s8 = sld [smem:[#allocation0]]
  $region46: #{tpu_custom_call.1} parent=0
    _
  %s10 = ssub.s32 1, %s8
  %s11 = scalar_select 0, %s10, %s8
  $region1: #{tpu_custom_call.1} parent=0
    #allocation2 [shape = 'u8[32768]{0}', space=vmem, size = 0x8000, scoped, tag = 'input window, operand 3, single buffered']
    #allocation3 [shape = 's32[1]{0}', space=sflag, size = 0x4, scoped, tag = 'scoped memory for tpu_custom_call.1']
    #allocation4 [shape = 'u8[32768]{0}', space=vmem, size = 0x8000, scoped, tag = 'input window, operand 5, single buffered']
    #allocation5 [shape = 's32[1]{0}', space=sflag, size = 0x4, scoped, tag = 'scoped memory for tpu_custom_call.1']
    %12 = vsyncpa [#allocation3], 0
    %13 = vsyncpa [#allocation5], 0
    // Predicated region
    $region2: #{tpu_custom_call.1} parent=1 // pred_check
      _
    $region3: #{tpu_custom_call.1} parent=1 // pred_check_branch
      %15 = sbr.rel (0) target = $region5
    $region4: #{tpu_custom_call.1} parent=1 // pred_region
      _
    $region5: #{tpu_custom_call.1} parent=1 // pred_fallthru
      _
    // Predicated region
    $region6: #{tpu_custom_call.1} parent=1 // pred_check
      _
    $region7: #{tpu_custom_call.1} parent=1 // pred_check_branch
      %17 = sbr.rel (0) target = $region9
    $region8: #{tpu_custom_call.1} parent=1 // pred_region
      _
    $region9: #{tpu_custom_call.1} parent=1 // pred_fallthru
      _
    // Predicated region
    $region10: #{tpu_custom_call.1} parent=1 // pred_check
      _
    $region11: #{tpu_custom_call.1} parent=1 // pred_check_branch
      %19 = sbr.rel (0) target = $region13
    $region12: #{tpu_custom_call.1} parent=1 // pred_region
      _
    $region13: #{tpu_custom_call.1} parent=1 // pred_fallthru
      _
    // Predicated region
    $region14: #{tpu_custom_call.1} parent=1 // pred_check
      _
    $region15: #{tpu_custom_call.1} parent=1 // pred_check_branch
      %21 = sbr.rel (0) target = $region17
    $region16: #{tpu_custom_call.1} parent=1 // pred_region
      %23 = vsyncadd [#allocation3], 0
      %s24 = sshll.u32 %s3, 4
      %s25 = int_to_ptr.hbm [resolvable:$true] %s24
      %s26 = sshll.u32 [#allocation2], 4
      %s27 = int_to_ptr.vmem [resolvable:$true] %s26
      %32 = dma.hbm_to_vmem [thread:$0]  %s25, 1024, %s27, [#allocation3], 64, 64, 4
    $region17: #{tpu_custom_call.1} parent=1 // pred_fallthru
      _
    // Predicated region
    $region18: #{tpu_custom_call.1} parent=1 // pred_check
      _
    $region19: #{tpu_custom_call.1} parent=1 // pred_check_branch
      %34 = sbr.rel (0) target = $region21
    $region20: #{tpu_custom_call.1} parent=1 // pred_region
      _
    $region21: #{tpu_custom_call.1} parent=1 // pred_fallthru
      _
    // Predicated region
    $region22: #{tpu_custom_call.1} parent=1 // pred_check
      _
    $region23: #{tpu_custom_call.1} parent=1 // pred_check_branch
      %36 = sbr.rel (0) target = $region25
    $region24: #{tpu_custom_call.1} parent=1 // pred_region
      %38 = vsyncadd [#allocation5], 0
      %s39 = sshll.u32 %s5, 4
      %s40 = int_to_ptr.hbm [resolvable:$true] %s39
      %s41 = sshll.u32 [#allocation4], 4
      %s42 = int_to_ptr.vmem [resolvable:$true] %s41
      %47 = dma.hbm_to_vmem [thread:$0]  %s40, 1024, %s42, [#allocation5], 64, 64, 4
    $region25: #{tpu_custom_call.1} parent=1 // pred_fallthru
      _
    // Predicated region
    $region26: #{tpu_custom_call.1} parent=1 // pred_check
      _
    $region27: #{tpu_custom_call.1} parent=1 // pred_check_branch
      %49 = sbr.rel (0) target = $region29
    $region28: #{tpu_custom_call.1} parent=1 // pred_region
      _
    $region29: #{tpu_custom_call.1} parent=1 // pred_fallthru
      _
    // Predicated region
    $region30: #{tpu_custom_call.1} parent=1 // pred_check
      _
    $region31: #{tpu_custom_call.1} parent=1 // pred_check_branch
      %51 = sbr.rel (0) target = $region33
    $region32: #{tpu_custom_call.1} parent=1 // pred_region
      %53 = dma.done [#allocation3], 1024
    $region33: #{tpu_custom_call.1} parent=1 // pred_fallthru
      _
    // Predicated region
    $region34: #{tpu_custom_call.1} parent=1 // pred_check
      _
    $region35: #{tpu_custom_call.1} parent=1 // pred_check_branch
      %55 = sbr.rel (0) target = $region37
    $region36: #{tpu_custom_call.1} parent=1 // pred_region
      %57 = dma.done [#allocation5], 1024
    $region37: #{tpu_custom_call.1} parent=1 // pred_fallthru
      _
    %v59 = vld [vmem:[%s0] sm:$0xf]
    %v60 = vld [vmem:[%s1] sm:$0x3]
    %v61 = vld [vmem:[%s2] sm:$0x1]
    %v63 = vperm.slane %v61, 0
    %vm65 = vcmask 31744
    %v67 = vsel %vm65, %v59, 0
    %vm69 = vcmask 1041408
    %v71 = vsel %vm69, %v60, 0
    %73 = vmatpush.bf16.msra.mxu0 0
    %74 = vmatpush.bf16.msra.mxu0 0
    %75 = vmatpush.bf16.msra.mxu0 0
    %76 = vmatpush.bf16.msra.mxu0 0
    %77 = vmatpush.bf16.msra.mxu0 0
    %78 = vmatpush.bf16.msra.mxu0 0
    %79 = vmatpush.bf16.msra.mxu0 0
    %80 = vmatpush.bf16.msra.mxu0 %v71
    %81 = vmatmul.bf16.gmra.mxu0 %v67
    %v82 = vpop.f32.mrf.mxu0
    %v83 = vadd.f32 %v63, %v82
    %v84 = vpop.f32.mrf.mxu0
    %85 = vdwg.mxu0
    %v86 = vmax.f32 %v83, 0.0
    %v87 = vpack.c.bf16 %v86, %v86
    %v88 = vld [vmem:[#allocation2] sm:$0xf]
    %v89 = vld [vmem:[#allocation2 + $0x4] sm:$0xf]
    %v90 = vld [vmem:[#allocation2 + $0x8] sm:$0xf]
    %v91 = vld [vmem:[#allocation2 + $0xc] sm:$0xf]
    %v92 = vld [vmem:[#allocation2 + $0x10] sm:$0xf]
    %v93 = vld [vmem:[#allocation2 + $0x14] sm:$0xf]
    %v94 = vld [vmem:[#allocation2 + $0x18] sm:$0xf]
    %v95 = vld [vmem:[#allocation2 + $0x1c] sm:$0xf]
    %v96 = vld [vmem:[#allocation2 + $0x20] sm:$0xf]
    %v97 = vld [vmem:[#allocation2 + $0x24] sm:$0xf]
    %v98 = vld [vmem:[#allocation2 + $0x28] sm:$0xf]
    %v99 = vld [vmem:[#allocation2 + $0x2c] sm:$0xf]
    %v100 = vld [vmem:[#allocation2 + $0x30] sm:$0xf]
    %v101 = vld [vmem:[#allocation2 + $0x34] sm:$0xf]
    %v102 = vld [vmem:[#allocation2 + $0x38] sm:$0xf]
    %v103 = vld [vmem:[#allocation2 + $0x3c] sm:$0xf]
    %v104 = vld [vmem:[%s4] sm:$0x1]
    %v106 = vperm.slane %v104, 0
    %v124 = vunpack.c.l.b16 %v88
    %v125 = vunpack.c.l.b16 %v89
    %v126 = vunpack.c.l.b16 %v90
    %v127 = vunpack.c.l.b16 %v91
    %v128 = vunpack.c.l.b16 %v92
    %v129 = vunpack.c.l.b16 %v93
    %v130 = vunpack.c.l.b16 %v94
    %v131 = vunpack.c.l.b16 %v95
    %v132 = vunpack.c.l.b16 %v96
    %v133 = vunpack.c.l.b16 %v97
    %v134 = vunpack.c.l.b16 %v98
    %v135 = vunpack.c.l.b16 %v99
    %v136 = vunpack.c.l.b16 %v100
    %v137 = vunpack.c.l.b16 %v101
    %v138 = vunpack.c.l.b16 %v102
    %v139 = vunpack.c.l.b16 %v103
    %v140 = vpack.c.b16 %v125, %v124
    %v141 = vpack.c.b16 %v127, %v126
    %v142 = vpack.c.b16 %v129, %v128
    %v143 = vpack.c.b16 %v131, %v130
    %v144 = vpack.c.b16 %v133, %v132
    %v145 = vpack.c.b16 %v135, %v134
    %v146 = vpack.c.b16 %v137, %v136
    %v147 = vpack.c.b16 %v139, %v138
    %156 = vmatpush.bf16.msra.mxu0 %v147
    %157 = vmatpush.bf16.msra.mxu0 %v146
    %158 = vmatpush.bf16.msra.mxu0 %v145
    %159 = vmatpush.bf16.msra.mxu0 %v144
    %160 = vmatpush.bf16.msra.mxu0 %v143
    %161 = vmatpush.bf16.msra.mxu0 %v142
    %162 = vmatpush.bf16.msra.mxu0 %v141
    %163 = vmatpush.bf16.msra.mxu0 %v140
    %164 = vmatmul.bf16.gmra.mxu0 %v87
    %v165 = vpop.f32.mrf.mxu0
    %v166 = vadd.f32 %v106, %v165
    %v167 = vpop.f32.mrf.mxu0
    %168 = vdwg.mxu0
    %v169 = vmax.f32 %v166, 0.0
    %v170 = vpack.c.bf16 %v169, %v169
    %v171 = vld [vmem:[#allocation4] sm:$0xf]
    %v172 = vld [vmem:[#allocation4 + $0x4] sm:$0xf]
    %v173 = vld [vmem:[#allocation4 + $0x8] sm:$0xf]
    %v174 = vld [vmem:[#allocation4 + $0xc] sm:$0xf]
    %v175 = vld [vmem:[#allocation4 + $0x10] sm:$0xf]
    %v176 = vld [vmem:[#allocation4 + $0x14] sm:$0xf]
    %v177 = vld [vmem:[#allocation4 + $0x18] sm:$0xf]
    %v178 = vld [vmem:[#allocation4 + $0x1c] sm:$0xf]
    %v179 = vld [vmem:[#allocation4 + $0x20] sm:$0xf]
    %v180 = vld [vmem:[#allocation4 + $0x24] sm:$0xf]
    %v181 = vld [vmem:[#allocation4 + $0x28] sm:$0xf]
    %v182 = vld [vmem:[#allocation4 + $0x2c] sm:$0xf]
    %v183 = vld [vmem:[#allocation4 + $0x30] sm:$0xf]
    %v184 = vld [vmem:[#allocation4 + $0x34] sm:$0xf]
    %v185 = vld [vmem:[#allocation4 + $0x38] sm:$0xf]
    %v186 = vld [vmem:[#allocation4 + $0x3c] sm:$0xf]
    %v187 = vld [vmem:[%s6] sm:$0x1]
    %v189 = vperm.slane %v187, 0
    %v207 = vunpack.c.l.b16 %v171
    %v208 = vunpack.c.l.b16 %v172
    %v209 = vunpack.c.l.b16 %v173
    %v210 = vunpack.c.l.b16 %v174
    %v211 = vunpack.c.l.b16 %v175
    %v212 = vunpack.c.l.b16 %v176
    %v213 = vunpack.c.l.b16 %v177
    %v214 = vunpack.c.l.b16 %v178
    %v215 = vunpack.c.l.b16 %v179
    %v216 = vunpack.c.l.b16 %v180
    %v217 = vunpack.c.l.b16 %v181
    %v218 = vunpack.c.l.b16 %v182
    %v219 = vunpack.c.l.b16 %v183
    %v220 = vunpack.c.l.b16 %v184
    %v221 = vunpack.c.l.b16 %v185
    %v222 = vunpack.c.l.b16 %v186
    %v223 = vpack.c.b16 %v208, %v207
    %v224 = vpack.c.b16 %v210, %v209
    %v225 = vpack.c.b16 %v212, %v211
    %v226 = vpack.c.b16 %v214, %v213
    %v227 = vpack.c.b16 %v216, %v215
    %v228 = vpack.c.b16 %v218, %v217
    %v229 = vpack.c.b16 %v220, %v219
    %v230 = vpack.c.b16 %v222, %v221
    %239 = vmatpush.bf16.msra.mxu0 %v230
    %240 = vmatpush.bf16.msra.mxu0 %v229
    %241 = vmatpush.bf16.msra.mxu0 %v228
    %242 = vmatpush.bf16.msra.mxu0 %v227
    %243 = vmatpush.bf16.msra.mxu0 %v226
    %244 = vmatpush.bf16.msra.mxu0 %v225
    %245 = vmatpush.bf16.msra.mxu0 %v224
    %246 = vmatpush.bf16.msra.mxu0 %v223
    %247 = vmatmul.bf16.gmra.mxu0 %v170
    %v248 = vpop.f32.mrf.mxu0
    %v249 = vadd.f32 %v189, %v248
    %v250 = vpop.f32.mrf.mxu0
    %251 = vdwg.mxu0
    %252 = vmax.xlane.f32.xlu0 %v249
    %v253 = vpop.xlane.xlu0 %252
    %v254 = vsub.f32 %v249, %v253
    %v255 = vmul.f32 %v254, 1.442695
    %v256 = vpow.pop %v255
    %257 = vadd.xlane.f32.xlu0 %v256
    %v258 = vpop.xlane.xlu0 %257
    %v259 = vrcp.pop %v258
    %v260 = vmul.f32 %v258, %v259
    %v261 = vsub.f32 1.0, %v260
    %v262 = vmul.f32 %v259, %v261
    %v263 = vadd.f32 %v259, %v262
    %vm264 = vweird.f32 %v258
    %vm265 = vweird.f32 %v259
    %vm266 = vmor %vm264, %vm265
    %v267 = vsel %vm266, %v259, %v263
    %v268 = vand.u32 2147483647, %v258
    %vm269 = vcmp.eq.f32.partialorder %v268, 8.507059e+37
    %v270 = vand.u32 %v258, 2147483648
    %v271 = vor.u32 1.1754944e-38, %v270
    %v272 = vsel %vm269, %v271, %v267
    %v273 = vmul.f32 1.0, %v272
    %v274 = vmul.f32 %v256, %v273
    %vm275 = vcmask 15360
    %276 = vst.msk [vmem:[%s7] sm:$0xff] %vm275, %v274
    // Predicated region
    $region38: #{tpu_custom_call.1} parent=1 // pred_check
      _
    $region39: #{tpu_custom_call.1} parent=1 // pred_check_branch
      %278 = sbr.rel (0) target = $region41
    $region40: #{tpu_custom_call.1} parent=1 // pred_region
      _
    $region41: #{tpu_custom_call.1} parent=1 // pred_fallthru
      _
    // Predicated region
    $region42: #{tpu_custom_call.1} parent=1 // pred_check
      _
    $region43: #{tpu_custom_call.1} parent=1 // pred_check_branch
      %280 = sbr.rel (0) target = $region45
    $region44: #{tpu_custom_call.1} parent=1 // pred_region
      _
    $region45: #{tpu_custom_call.1} parent=1 // pred_fallthru
      _
    %281 = vsyncpa [#allocation3], 1
    %282 = vsyncpa [#allocation5], 1

</llo_original>
